<compile_context>
chip_gen: v7x
topology: tpu7x:2x2x1
jax: 0.10.0
libtpu: 0.0.40
codegen_flags: <defaults>
</compile_context>

<pallas_src>
import functools

import jax
import jax.numpy as jnp
from jax.experimental import pallas as pl
from jax.experimental.pallas import tpu as pltpu


# ---------------------------------------------------------------------------
# Kernel
# ---------------------------------------------------------------------------
def _pool_kernel(attn_ref, x_ref, o_ref, *, length, l_tile):
    """out[b, c] (+)= sum_l attn[c, l] * x[b, c, l] over the current L tile."""
    l = pl.program_id(1)

    x = x_ref[...]                                     # (tb, C, tl), x dtype
    attn = attn_ref[...].astype(x.dtype)               # (C, tl); bf16 mul on bf16 in
    prod = (x * attn[None, :, :]).astype(jnp.float32)  # accumulate in f32

    if length % l_tile:                                # static: mask padded tail lanes
        lane = jax.lax.broadcasted_iota(jnp.int32, prod.shape, dimension=2)
        prod = jnp.where(l * l_tile + lane < length, prod, 0.0)

    psum = jnp.sum(prod, axis=-1)                      # (tb, C) f32

    @pl.when(l == 0)
    def _():
        o_ref[...] = psum

    @pl.when(l > 0)
    def _():
        o_ref[...] += psum


# ---------------------------------------------------------------------------
# Tiling helpers (generation-aware)
# ---------------------------------------------------------------------------
def _vmem_capacity_bytes() -> int:
    try:
        return int(pltpu.get_tpu_info().vmem_capacity_bytes)
    except Exception:
        return 64 << 20            # v7x per-TensorCore VMEM (smallest current gen)


def _choose_tiles(batch, channels, length, x_itemsize, vmem_budget,
                  x_buf_cap=16 << 20):
    """Pick (batch_tile, length_tile).

    Accounts for 2x pipeline buffering of both the x block and the attn block
    so the chosen tiles really fit `vmem_budget`, and targets <= `x_buf_cap`
    bytes per x buffer (~8-16 MiB amortizes the ~0.35us/step pipeline overhead
    and reaches the HBM roofline on every generation).
    """
    row_bytes = channels * length * x_itemsize          # one (C, L) batch row
    attn_bytes = 2 * channels * length * 4              # double-buffered f32 attn

    # --- Full-L blocks (no inner reduction axis) if a decent batch tile fits.
    avail = vmem_budget - attn_bytes
    if avail > 0:
        rows = min(avail // (2 * row_bytes), x_buf_cap // row_bytes)
        if rows >= batch:
            return batch, length
        if rows >= 8:
            return int(rows // 8) * 8, length

    # --- Otherwise tile the pooled dimension (inner "arbitrary" grid axis).
    tb = batch if batch < 8 else 8
    tl_budget = vmem_budget // (2 * channels * (tb * x_itemsize + 4))
    tl_cap = x_buf_cap // max(1, tb * channels * x_itemsize)
    tl = min(tl_budget, tl_cap)
    if tl >= length:
        return tb, length
    return tb, max(128, (tl // 128) * 128)              # lane-aligned blocks


# ---------------------------------------------------------------------------
# Wrapper
# ---------------------------------------------------------------------------
def gapw(x: jax.Array, w: jax.Array, *, batch_tile: int | None = None,
         length_tile: int | None = None) -> jax.Array:
    """x: (B, C, L) float32/bfloat16;  w: (1, C, order) float32  ->  (B, C) x.dtype."""
    B, C, L = x.shape
    order = w.shape[-1]

    # ---- Batch-invariant attention weights (tiny, runs once): plain XLA. ----
    w2d = w.reshape(C, order).astype(jnp.float32)
    pos = jnp.linspace(0.0, 1.0, L, dtype=jnp.float32)                  # (L,)
    powers = jnp.stack([pos ** k for k in range(order)], axis=0)        # (order, L)
    attn = jax.nn.softmax(w2d @ powers, axis=-1).astype(jnp.float32)    # (C, L)

    # ---- Tile selection + explicit VMEM limit ------------------------------
    vmem_cap = _vmem_capacity_bytes()
    vmem_budget = int(vmem_cap * 0.7)       # headroom for Mosaic scratch / out bufs
    itemsize = jnp.dtype(x.dtype).itemsize
    tb_auto, tl_auto = _choose_tiles(B, C, L, itemsize, vmem_budget)
    tb = batch_tile if batch_tile is not None else tb_auto
    tl = length_tile if length_tile is not None else tl_auto
    grid_b = pl.cdiv(B, tb)
    grid_l = pl.cdiv(L, tl)

    cost = pl.CostEstimate(
        flops=2 * B * C * L,
        transcendentals=0,
        bytes_accessed=B * C * L * itemsize + grid_b * C * L * 4 + B * C * 4,
    )

    out_f32 = pl.pallas_call(
        functools.partial(_pool_kernel, length=L, l_tile=tl),
        out_shape=jax.ShapeDtypeStruct((B, C), jnp.float32),
        grid_spec=pltpu.PrefetchScalarGridSpec(
            num_scalar_prefetch=0,
            grid=(grid_b, grid_l),
            in_specs=[
                pl.BlockSpec((C, tl), lambda b, l: (0, l)),          # attn
                pl.BlockSpec((tb, C, tl), lambda b, l: (b, 0, l)),   # x
            ],
            out_specs=pl.BlockSpec((tb, C), lambda b, l: (b, 0)),    # resident acc
        ),
        compiler_params=pltpu.CompilerParams(
            dimension_semantics=("parallel", "arbitrary"),
            vmem_limit_bytes=min(max(32 << 20, int(vmem_cap * 0.9)), 128 << 20),
        ),
        cost_estimate=cost,
    )(attn, x)

    return out_f32.astype(x.dtype)                                     # (B, C)


# ---------------------------------------------------------------------------
# Pure-JAX reference (correctness check)
# ---------------------------------------------------------------------------
def gapw_reference(x: jax.Array, w: jax.Array) -> jax.Array:
    B, C, L = x.shape
    order = w.shape[-1]
    pos = jnp.linspace(0.0, 1.0, L, dtype=jnp.float32)
    powers = jnp.stack([pos ** k for k in range(order)], axis=0)        # (order, L)
    logits = jnp.einsum("ck,kl->cl", w.reshape(C, order).astype(jnp.float32), powers)
    attn = jax.nn.softmax(logits, axis=-1)
    return jnp.einsum("bcl,cl->bc", x.astype(jnp.float32), attn)        # (B, C) f32


if __name__ == "__main__":
    key = jax.random.PRNGKey(0)
    B, C, L, order = 2, 4, 16, 3
    kx, kb, kl = jax.random.split(key, 3)

    x = jax.random.normal(kx, (B, C, L), dtype=jnp.float32)

    # Parameter init exactly as the module's reset_parameters: zeros -> plain GAP.
    w0 = jnp.zeros((1, C, order), dtype=jnp.float32)
    out0 = jax.block_until_ready(gapw(x, w0))
    assert out0.shape == (B, C)
    assert jnp.allclose(out0, gapw_reference(x, w0), atol=1e-5, rtol=1e-5)

    # Non-trivial weights (deterministic) to exercise the weighted path.
    w1 = 0.1 * jnp.arange(C * order, dtype=jnp.float32).reshape(1, C, order)
    out1 = jax.block_until_ready(gapw(x, w1))
    assert jnp.allclose(out1, gapw_reference(x, w1), atol=1e-5, rtol=1e-5)

    # Batch-tiled grid with a partial last block (B % batch_tile != 0).
    xb = jax.random.normal(kb, (12, C, L), dtype=jnp.float32)
    out2 = jax.block_until_ready(gapw(xb, w1, batch_tile=8))
    assert jnp.allclose(out2, gapw_reference(xb, w1), atol=1e-5, rtol=1e-5)

    # L-tiled reduction path, including a masked partial trailing L block.
    xl = jax.random.normal(kl, (B, C, 192), dtype=jnp.float32)
    wl = 0.05 * jnp.arange(C * order, dtype=jnp.float32).reshape(1, C, order)
    out3 = jax.block_until_ready(gapw(xl, wl, length_tile=128))
    assert jnp.allclose(out3, gapw_reference(xl, wl), atol=1e-5, rtol=1e-5)

    # bf16 input: bf16 multiply, f32 accumulate, bf16 output.
    xh = x.astype(jnp.bfloat16)
    outh = jax.block_until_ready(gapw(xh, w1))
    assert outh.dtype == jnp.bfloat16
    assert jnp.allclose(outh.astype(jnp.float32), gapw_reference(xh, w1),
                        atol=5e-2, rtol=5e-2)

    print("KERNEL_OK")
</pallas_src>

<mosaic_0001>
module attributes {stable_mosaic.version = 11 : i64} {
  func.func @_pool_kernel(%arg0: i32, %arg1: i32, %arg2: memref<4x16xf32, #tpu.memory_space<vmem>>, %arg3: memref<2x4x16xf32, #tpu.memory_space<vmem>>, %arg4: memref<2x4xf32, #tpu.memory_space<vmem>>) attributes {dimension_semantics = [#tpu.dimension_semantics<parallel>, #tpu.dimension_semantics<arbitrary>], iteration_bounds = array<i64: 1, 1>, scalar_prefetch = 0 : i64, scratch_operands = 0 : i64, tpu.core_type = #tpu.core_type<tc>, window_params = [{transform_indices = @transform_0, window_bounds = array<i64: 4, 16>}, {transform_indices = @transform_1, window_bounds = array<i64: 2, 4, 16>}, {transform_indices = @transform_2, window_bounds = array<i64: 2, 4>}]} {
    %c0 = arith.constant 0 : index
    %c0_0 = arith.constant 0 : index
    %c0_1 = arith.constant 0 : index
    %0 = vector.load %arg3[%c0, %c0_0, %c0_1] : memref<2x4x16xf32, #tpu.memory_space<vmem>>, vector<2x4x16xf32>
    %c0_2 = arith.constant 0 : index
    %c0_3 = arith.constant 0 : index
    %1 = vector.load %arg2[%c0_2, %c0_3] : memref<4x16xf32, #tpu.memory_space<vmem>>, vector<4x16xf32>
    %2 = vector.shape_cast %1 : vector<4x16xf32> to vector<1x4x16xf32>
    %3 = vector.broadcast %2 : vector<1x4x16xf32> to vector<2x4x16xf32>
    %4 = arith.mulf %0, %3 : vector<2x4x16xf32>
    %cst = arith.constant dense<0.000000e+00> : vector<2x4xf32>
    %5 = vector.multi_reduction <add>, %4, %cst [2] : vector<2x4x16xf32> to vector<2x4xf32>
    %c0_i32 = arith.constant 0 : i32
    %6 = arith.cmpi eq, %arg1, %c0_i32 : i32
    %7 = arith.extui %6 : i1 to i32
    %c0_i32_4 = arith.constant 0 : i32
    %8 = arith.cmpi ne, %7, %c0_i32_4 : i32
    scf.if %8 {
      %c0_7 = arith.constant 0 : index
      %c0_8 = arith.constant 0 : index
      %12 = vector.load %arg4[%c0_7, %c0_8] : memref<2x4xf32, #tpu.memory_space<vmem>>, vector<2x4xf32>
      tpu.vector_store %arg4[%c0_7, %c0_8], %5 {strides = array<i32>} : memref<2x4xf32, #tpu.memory_space<vmem>>, vector<2x4xf32>,
    } else {
    }
    %c0_i32_5 = arith.constant 0 : i32
    %9 = arith.cmpi sgt, %arg1, %c0_i32_5 : i32
    %10 = arith.extui %9 : i1 to i32
    %c0_i32_6 = arith.constant 0 : i32
    %11 = arith.cmpi ne, %10, %c0_i32_6 : i32
    scf.if %11 {
      %c0_7 = arith.constant 0 : index
      %c0_8 = arith.constant 0 : index
      %12 = vector.load %arg4[%c0_7, %c0_8] : memref<2x4xf32, #tpu.memory_space<vmem>>, vector<2x4xf32>
      %13 = arith.addf %12, %5 : vector<2x4xf32>
      %c0_9 = arith.constant 0 : index
      %c0_10 = arith.constant 0 : index
      %14 = vector.load %arg4[%c0_9, %c0_10] : memref<2x4xf32, #tpu.memory_space<vmem>>, vector<2x4xf32>
      tpu.vector_store %arg4[%c0_9, %c0_10], %13 {strides = array<i32>} : memref<2x4xf32, #tpu.memory_space<vmem>>, vector<2x4xf32>,
    } else {
    }
    return
  }
  func.func @transform_0(%arg0: i32, %arg1: i32) -> (i32, i32) {
    %c0_i32 = arith.constant 0 : i32
    %c0_i32_0 = arith.constant 0 : i32
    return %c0_i32, %arg1 : i32, i32
  }
  func.func @transform_1(%arg0: i32, %arg1: i32) -> (i32, i32, i32) {
    %c0_i32 = arith.constant 0 : i32
    %c0_i32_0 = arith.constant 0 : i32
    return %arg0, %c0_i32, %arg1 : i32, i32, i32
  }
  func.func @transform_2(%arg0: i32, %arg1: i32) -> (i32, i32) {
    %c0_i32 = arith.constant 0 : i32
    %c0_i32_0 = arith.constant 0 : i32
    return %arg0, %c0_i32 : i32, i32
  }
}

</mosaic_0001>

<llo_original>
// kernel: tpu_custom_call.1
$region0: #{tpu_custom_call.1}
  #allocation0 [shape = 'u32[]', space=smem, size = 0x4, offset = 0x4, fixed_abs, tag = 'smem constant byte address 0x4 - core index']
  #allocation1 [shape = 'u32[144,128]{1,0:T(1,128)}', space=vmem, size = 0x12000, scoped, tag = 'internal scratch']
  %s0 = inlined_call_operand.hbm [shape: f32[4,16], index: 0, kind: input, shape index: {}]
  %s1 = inlined_call_operand.hbm [shape: f32[2,4,16], index: 1, kind: input, shape index: {}]
  %s2 = inlined_call_operand.hbm [shape: f32[2,4], index: 2, kind: output, shape index: {}]
  %s3 = sld [smem:[#allocation0]]
  $region34: #{tpu_custom_call.1} parent=0
    _
  %s5 = ssub.s32 1, %s3
  %s6 = scalar_select 0, %s5, %s3
  $region1: #{tpu_custom_call.1} parent=0
    #allocation2 [shape = 'u8[2048]{0}', space=vmem, size = 0x800, scoped, tag = 'input window, operand 0, single buffered']
    #allocation3 [shape = 's32[1]{0}', space=sflag, size = 0x4, scoped, tag = 'scoped memory for tpu_custom_call.1']
    #allocation4 [shape = 's32[1]{0}', space=sflag, size = 0x4, scoped, tag = 'scoped memory for tpu_custom_call.1']
    #allocation5 [shape = 'u8[4096]{0}', space=vmem, size = 0x1000, scoped, tag = 'input window, operand 1, single buffered']
    #allocation6 [shape = 's32[1]{0}', space=sflag, size = 0x4, scoped, tag = 'scoped memory for tpu_custom_call.1']
    #allocation7 [shape = 'u8[1024]{0}', space=vmem, size = 0x400, scoped, tag = 'output window, operand 0, single buffered']
    %7 = vsyncpa [#allocation3], 0
    %8 = vsyncpa [#allocation6], 0
    %9 = vsyncpa [#allocation4], 0
    // Predicated region
    $region2: #{tpu_custom_call.1} parent=1 // pred_check
      _
    $region3: #{tpu_custom_call.1} parent=1 // pred_check_branch
      %11 = sbr.rel (0) target = $region5
    $region4: #{tpu_custom_call.1} parent=1 // pred_region
      %s13 = ssub.s32 64, 64
      %14 = vsyncadd [#allocation3], %s13
      %s16 = sshll.u32 [#allocation2], 4
      %s17 = int_to_ptr.vmem [resolvable:$true] %s16
      %19 = dma.hbm_to_vmem [thread:$0]  %s0, 64, %s17, [#allocation3]
    $region5: #{tpu_custom_call.1} parent=1 // pred_fallthru
      _
    // Predicated region
    $region6: #{tpu_custom_call.1} parent=1 // pred_check
      _
    $region7: #{tpu_custom_call.1} parent=1 // pred_check_branch
      %21 = sbr.rel (0) target = $region9
    $region8: #{tpu_custom_call.1} parent=1 // pred_region
      %s23 = ssub.s32 128, 128
      %24 = vsyncadd [#allocation6], %s23
      %s25 = sshll.u32 [#allocation5], 4
      %s26 = int_to_ptr.vmem [resolvable:$true] %s25
      %31 = dma.hbm_to_vmem [thread:$0]  %s1, 128, %s26, [#allocation6], 64, 64, 4
    $region9: #{tpu_custom_call.1} parent=1 // pred_fallthru
      _
    // Predicated region
    $region10: #{tpu_custom_call.1} parent=1 // pred_check
      _
    $region11: #{tpu_custom_call.1} parent=1 // pred_check_branch
      %33 = sbr.rel (0) target = $region13
    $region12: #{tpu_custom_call.1} parent=1 // pred_region
      %34 = dma.done [#allocation3], 64
    $region13: #{tpu_custom_call.1} parent=1 // pred_fallthru
      _
    // Predicated region
    $region14: #{tpu_custom_call.1} parent=1 // pred_check
      _
    $region15: #{tpu_custom_call.1} parent=1 // pred_check_branch
      %36 = sbr.rel (0) target = $region17
    $region16: #{tpu_custom_call.1} parent=1 // pred_region
      %37 = dma.done [#allocation6], 128
    $region17: #{tpu_custom_call.1} parent=1 // pred_fallthru
      _
    %v38 = vld [vmem:[#allocation5] sm:$0xf]
    %v39 = vld [vmem:[#allocation5 + $0x4] sm:$0xf]
    %v40 = vld [vmem:[#allocation2] sm:$0xf]
    %v41 = vmul.f32 %v38, %v40
    %v42 = vmul.f32 %v39, %v40
    %vm43 = vcmask 125952
    %v44 = vsel %vm43, %v41, 0.0
    %45 = vadd.xlane.f32.xlu0 %v44
    %v46 = vpop.xlane.xlu0 %45
    %v47 = vsel %vm43, %v42, 0.0
    %48 = vadd.xlane.f32.xlu0 %v47
    %v49 = vpop.xlane.xlu0 %48
    %p50 = scmp.eq.s32.totalorder 0, 0
    // Predicated region
    $region18: #{tpu_custom_call.1} parent=1 // pred_check
      %p51 = pneg %p50
    $region19: #{tpu_custom_call.1} parent=1 // pred_check_branch
      %53 = sbr.rel (%p51) target = $region21
    $region20: #{tpu_custom_call.1} parent=1 // pred_region
      %v56 = vlaneseq
      %v57 = vand.u32 %v56, 127
      %v58 = vlaneseq
      %v59 = vshrl.u32 %v58, 7
      %v60 = vsub.s32 %v57, %v59
      %v61 = vrot.slane %v46, %v60
      %v62 = vlaneseq
      %v63 = vshrl.u32 %v62, 7
      %v64 = vsub.s32 %v57, %v63
      %v65 = vrot.slane %v49, %v64
      %vm66 = vcmask 1041409
      %v67 = vsel %vm66, %v65, %v61
      %vm69 = vcmask 25600
      %70 = vst.msk [vmem:[#allocation7] sm:$0x3] %vm69, %v67
    $region21: #{tpu_custom_call.1} parent=1 // pred_fallthru
      _
    %p71 = scmp.gt.s32.totalorder 0, 0
    // Predicated region
    $region22: #{tpu_custom_call.1} parent=1 // pred_check
      %p72 = pneg %p71
    $region23: #{tpu_custom_call.1} parent=1 // pred_check_branch
      %74 = sbr.rel (%p72) target = $region25
    $region24: #{tpu_custom_call.1} parent=1 // pred_region
      %v75 = vld [vmem:[#allocation7] sm:$0x3]
      %v78 = vlaneseq
      %v79 = vand.u32 %v78, 127
      %v80 = vlaneseq
      %v81 = vshrl.u32 %v80, 7
      %v82 = vsub.s32 %v79, %v81
      %v83 = vrot.slane %v46, %v82
      %v84 = vlaneseq
      %v85 = vshrl.u32 %v84, 7
      %v86 = vsub.s32 %v79, %v85
      %v87 = vrot.slane %v49, %v86
      %vm88 = vcmask 1041409
      %v89 = vsel %vm88, %v87, %v83
      %v91 = vadd.f32 %v75, %v89
      %vm92 = vcmask 25600
      %93 = vst.msk [vmem:[#allocation7] sm:$0x3] %vm92, %v91
    $region25: #{tpu_custom_call.1} parent=1 // pred_fallthru
      _
    // Predicated region
    $region26: #{tpu_custom_call.1} parent=1 // pred_check
      _
    $region27: #{tpu_custom_call.1} parent=1 // pred_check_branch
      %95 = sbr.rel (0) target = $region29
    $region28: #{tpu_custom_call.1} parent=1 // pred_region
      %s97 = ssub.s32 32, 32
      %98 = vsyncadd [#allocation4], %s97
      %s100 = sshll.u32 [#allocation7], 4
      %s101 = int_to_ptr.vmem [resolvable:$true] %s100
      %103 = dma.vmem_to_hbm [thread:$0]  %s101, 32, %s2, [#allocation4]
    $region29: #{tpu_custom_call.1} parent=1 // pred_fallthru
      _
    // Predicated region
    $region30: #{tpu_custom_call.1} parent=1 // pred_check
      _
    $region31: #{tpu_custom_call.1} parent=1 // pred_check_branch
      %105 = sbr.rel (0) target = $region33
    $region32: #{tpu_custom_call.1} parent=1 // pred_region
      %106 = dma.done [#allocation4], 32
    $region33: #{tpu_custom_call.1} parent=1 // pred_fallthru
      _
    %107 = vsyncpa [#allocation3], 1
    %108 = vsyncpa [#allocation6], 1
    %109 = vsyncpa [#allocation4], 1

</llo_original>
